<compile_context>
chip_gen: v7x
topology: tpu7x:2x2x1
jax: 0.10.0
libtpu: 0.0.40
codegen_flags: <defaults>
</compile_context>

<pallas_src>
import functools

import jax
import jax.numpy as jnp
from jax.experimental import pallas as pl
from jax.experimental.pallas import tpu as pltpu

LANE = 128      # lane width (last dim)
SUBLANE = 8     # sublane width (second-to-last dim)


def _round_up(x, m):
    return ((x + m - 1) // m) * m


def _ode_mlp_kernel(spb, bp, dp, ts_ref, ys_ref, w1_ref, b1_ref, w2_ref, b2_ref, o_ref):
    """One grid step: evaluate the MLP ODE func for `spb` solver steps at once.

    ts_ref : SMEM [S_pad]            (scalar-prefetched per-step times, f32)
    ys_ref : VMEM [spb, bp, dp]      (f32, zero-padded states)
    w1_ref : VMEM [dp, hp]  (bf16)   -- resident across the grid
    b1_ref : VMEM [1, hp]   (f32)
    w2_ref : VMEM [hp, dp]  (bf16)
    b2_ref : VMEM [1, dp]   (f32)
    o_ref  : VMEM [spb, bp, dp] (f32)
    """
    i = pl.program_id(0)

    # Stack all steps into one [spb*bp, dp] LHS -> one big MXU matmul (M-fill).
    y2 = ys_ref[...].reshape(spb * bp, dp).astype(w1_ref.dtype)
    h = jnp.dot(y2, w1_ref[...], preferred_element_type=jnp.float32)  # [spb*bp, hp] f32

    b1 = b1_ref[...]  # [1, hp] f32
    # Per-step time conditioning: fold t into the bias once per step (SMEM scalar),
    # applied to an (8,128)-aligned row slab of the pre-activation.
    pre = []
    for s in range(spb):  # static unroll
        t = ts_ref[i * spb + s]
        pre.append(h[s * bp:(s + 1) * bp, :] + (b1 + t))
    h_pre = jnp.concatenate(pre, axis=0) if spb > 1 else pre[0]

    h_act = jnp.tanh(h_pre).astype(w2_ref.dtype)  # f32 tanh (EUP), then bf16 for MXU
    out = jnp.dot(h_act, w2_ref[...], preferred_element_type=jnp.float32) + b2_ref[...]
    o_ref[...] = out.reshape(spb, bp, dp).astype(o_ref.dtype)


def _pad_params(w1, b1, w2, b2):
    d, h = w1.shape
    dp = _round_up(d, LANE)
    hp = _round_up(h, LANE)
    w1p = jnp.zeros((dp, hp), jnp.float32).at[:d, :h].set(w1).astype(jnp.bfloat16)
    b1p = jnp.zeros((1, hp), jnp.float32).at[:, :h].set(jnp.reshape(b1, (1, h)))
    w2p = jnp.zeros((hp, dp), jnp.float32).at[:h, :d].set(w2).astype(jnp.bfloat16)
    b2p = jnp.zeros((1, dp), jnp.float32).at[:, :d].set(jnp.reshape(b2, (1, d)))
    return w1p, b1p, w2p, b2p, d, h, dp, hp


def make_func_tensor_multi(w1, b1, w2, b2, steps_per_block=16):
    """Returns f(ts, ys): evaluate the ODE func at S (t, y) pairs in one pallas_call.

    ts: [S] f32, ys: [S, B, D]  ->  [S, B, D]
    """
    w1p, b1p, w2p, b2p, d, h, dp, hp = _pad_params(w1, b1, w2, b2)

    def func_tensor_multi(ts, ys):
        s, b, d_in = ys.shape
        assert d_in == d, f"feature dim mismatch: {d_in} vs {d}"

        spb = max(1, min(steps_per_block, s))   # steps stacked per grid iteration
        s_pad = _round_up(s, spb)
        bp = _round_up(b, SUBLANE)

        ys_pad = jnp.zeros((s_pad, bp, dp), jnp.float32)
        ys_pad = ys_pad.at[:s, :b, :d].set(ys.astype(jnp.float32))
        ts_pad = jnp.zeros((s_pad,), jnp.float32).at[:s].set(ts.astype(jnp.float32))

        grid = (s_pad // spb,)
        kernel = functools.partial(_ode_mlp_kernel, spb, bp, dp)

        flops = 4 * s_pad * bp * dp * hp                      # two matmuls
        transcendentals = s_pad * bp * hp                     # tanh
        bytes_accessed = (
            ys_pad.size * 4 + s_pad * bp * dp * 4             # states in/out (f32)
            + (w1p.size + w2p.size) * 2                       # bf16 weights
            + (b1p.size + b2p.size) * 4                       # f32 biases
            + s_pad * 4                                       # times
        )

        out = pl.pallas_call(
            kernel,
            out_shape=jax.ShapeDtypeStruct((s_pad, bp, dp), jnp.float32),
            grid_spec=pltpu.PrefetchScalarGridSpec(
                num_scalar_prefetch=1,                        # ts -> SMEM
                grid=grid,
                in_specs=[
                    pl.BlockSpec((spb, bp, dp), lambda i, ts_s: (i, 0, 0)),  # ys
                    pl.BlockSpec((dp, hp), lambda i, ts_s: (0, 0)),          # W1 (resident)
                    pl.BlockSpec((1, hp), lambda i, ts_s: (0, 0)),           # b1 (resident)
                    pl.BlockSpec((hp, dp), lambda i, ts_s: (0, 0)),          # W2 (resident)
                    pl.BlockSpec((1, dp), lambda i, ts_s: (0, 0)),           # b2 (resident)
                ],
                out_specs=pl.BlockSpec((spb, bp, dp), lambda i, ts_s: (i, 0, 0)),
            ),
            compiler_params=pltpu.CompilerParams(
                dimension_semantics=("parallel",),            # shard step-blocks on v7x's 2 TCs
                vmem_limit_bytes=32 * 1024 * 1024,
            ),
            cost_estimate=pl.CostEstimate(
                flops=int(flops),
                transcendentals=int(transcendentals),
                bytes_accessed=int(bytes_accessed),
            ),
        )(ts_pad, ys_pad, w1p, b1p, w2p, b2p)

        return out[:s, :b, :d].astype(ys.dtype)

    return func_tensor_multi


def make_func_tensor(w1, b1, w2, b2):
    """Single-evaluation f(t, y) (exact FuncWrapper hot path), same Pallas kernel."""
    multi = make_func_tensor_multi(w1, b1, w2, b2, steps_per_block=1)

    def func_tensor(t, y):
        ts = jnp.asarray(t, jnp.float32).reshape(1)
        return multi(ts, y[None])[0]

    return func_tensor


class FuncWrapper:
    """Wrapper to convert a tensor-input tensor-output function into
    tuple-input tuple-output (mirrors the PyTorch module exactly)."""

    def __init__(self, func_tensor, func_tensor_multi=None):
        self.func_tensor = func_tensor
        self.func_tensor_multi = func_tensor_multi

    def __call__(self, t, y):
        return (self.func_tensor(t, y[0]),)

    forward = __call__

    def forward_many(self, ts, ys):
        """Fused fast path: S evaluations of the wrapped func in ONE pallas_call.
        ts: [S], ys: tuple whose [0] is [S, B, D]. Semantics == S calls of forward."""
        assert self.func_tensor_multi is not None
        return (self.func_tensor_multi(ts, ys[0]),)


if __name__ == "__main__":
    # Small shapes consistent with an ODE-func use of FuncWrapper.
    B, D, H = 8, 32, 64
    S = 40  # number of solver evaluations fused into one kernel call

    key = jax.random.PRNGKey(0)
    k_y, k_w1, k_b1, k_w2, k_b2, k_ts, k_ys = jax.random.split(key, 7)

    y = jax.random.normal(k_y, (B, D), dtype=jnp.float32)
    w1 = jax.random.normal(k_w1, (D, H), dtype=jnp.float32) * 0.1
    b1 = jax.random.normal(k_b1, (1, H), dtype=jnp.float32) * 0.1
    w2 = jax.random.normal(k_w2, (H, D), dtype=jnp.float32) * 0.1
    b2 = jax.random.normal(k_b2, (1, D), dtype=jnp.float32) * 0.1

    t = jnp.float32(0.5)
    ts = jax.random.uniform(k_ts, (S,), dtype=jnp.float32)
    ys = jax.random.normal(k_ys, (S, B, D), dtype=jnp.float32)

    func_tensor = make_func_tensor(w1, b1, w2, b2)
    func_tensor_multi = make_func_tensor_multi(w1, b1, w2, b2, steps_per_block=16)
    wrapper = FuncWrapper(func_tensor, func_tensor_multi)

    # Reference mirroring the kernel numerics (bf16 MXU inputs, f32 accumulation,
    # f32 bias / time-conditioning / tanh).
    def ref_func(t_, y_):
        h_ = jnp.dot(y_.astype(jnp.bfloat16), w1.astype(jnp.bfloat16),
                     preferred_element_type=jnp.float32)
        h_ = jnp.tanh(h_ + b1 + t_)
        return jnp.dot(h_.astype(jnp.bfloat16), w2.astype(jnp.bfloat16),
                       preferred_element_type=jnp.float32) + b2

    # 1) Exact FuncWrapper semantics: tuple-in / tuple-out, single evaluation.
    out_tuple = wrapper(t, (y,))
    out = jax.block_until_ready(out_tuple[0])
    assert isinstance(out_tuple, tuple) and len(out_tuple) == 1
    assert out.shape == (B, D)
    ref = ref_func(t, y)
    assert jnp.allclose(out, ref, atol=2e-3, rtol=2e-3), float(jnp.max(jnp.abs(out - ref)))

    # 2) Fused multi-evaluation path (one pallas_call for S evaluations).
    outs_tuple = wrapper.forward_many(ts, (ys,))
    outs = jax.block_until_ready(outs_tuple[0])
    assert isinstance(outs_tuple, tuple) and len(outs_tuple) == 1
    assert outs.shape == (S, B, D)
    refs = jax.vmap(ref_func)(ts, ys)
    assert jnp.allclose(outs, refs, atol=2e-3, rtol=2e-3), float(jnp.max(jnp.abs(outs - refs)))

    print("KERNEL_OK")
</pallas_src>

<mosaic_0001>
module attributes {stable_mosaic.version = 11 : i64} {
  func.func @_ode_mlp_kernel(%arg0: i32, %arg1: memref<1xf32, #tpu.memory_space<smem>>, %arg2: memref<1x8x128xf32, #tpu.memory_space<vmem>>, %arg3: memref<128x128xbf16, #tpu.memory_space<vmem>>, %arg4: memref<1x128xf32, #tpu.memory_space<vmem>>, %arg5: memref<128x128xbf16, #tpu.memory_space<vmem>>, %arg6: memref<1x128xf32, #tpu.memory_space<vmem>>, %arg7: memref<1x8x128xf32, #tpu.memory_space<vmem>>) attributes {dimension_semantics = [#tpu.dimension_semantics<parallel>], iteration_bounds = array<i64: 1>, scalar_prefetch = 1 : i64, scratch_operands = 0 : i64, tpu.core_type = #tpu.core_type<tc>, window_params = [{transform_indices = @transform_0, window_bounds = array<i64: 1, 8, 128>}, {pipeline_mode = #tpu.pipeline_mode<synchronous>, transform_indices = @transform_1, window_bounds = array<i64: 128, 128>}, {pipeline_mode = #tpu.pipeline_mode<synchronous>, transform_indices = @transform_2, window_bounds = array<i64: 1, 128>}, {pipeline_mode = #tpu.pipeline_mode<synchronous>, transform_indices = @transform_3, window_bounds = array<i64: 128, 128>}, {pipeline_mode = #tpu.pipeline_mode<synchronous>, transform_indices = @transform_4, window_bounds = array<i64: 1, 128>}, {transform_indices = @transform_5, window_bounds = array<i64: 1, 8, 128>}]} {
    %c0 = arith.constant 0 : index
    %c0_0 = arith.constant 0 : index
    %c0_1 = arith.constant 0 : index
    %0 = vector.load %arg2[%c0, %c0_0, %c0_1] : memref<1x8x128xf32, #tpu.memory_space<vmem>>, vector<1x8x128xf32>
    %1 = vector.shape_cast %0 : vector<1x8x128xf32> to vector<8x128xf32>
    %2 = arith.truncf %1 : vector<8x128xf32> to vector<8x128xbf16>
    %c0_2 = arith.constant 0 : index
    %c0_3 = arith.constant 0 : index
    %3 = vector.load %arg3[%c0_2, %c0_3] : memref<128x128xbf16, #tpu.memory_space<vmem>>, vector<128x128xbf16>
    %cst = arith.constant dense<0.000000e+00> : vector<8x128xf32>
    %4 = tpu.matmul %2, %3, %cst {dimension_numbers = #tpu.dot_dimension_numbers<[1], [0], [0], [1], [0, 0, 1, 1], [], []>} : vector<8x128xbf16>, vector<128x128xbf16>, vector<8x128xf32> -> vector<8x128xf32>
    %c0_4 = arith.constant 0 : index
    %c0_5 = arith.constant 0 : index
    %5 = vector.load %arg4[%c0_4, %c0_5] : memref<1x128xf32, #tpu.memory_space<vmem>>, vector<1x128xf32>
    %c1_i32 = arith.constant 1 : i32
    %6 = arith.muli %arg0, %c1_i32 : i32
    %c0_i32 = arith.constant 0 : i32
    %7 = arith.addi %6, %c0_i32 : i32
    %8 = arith.index_cast %7 : i32 to index
    %9 = memref.load %arg1[%8] : memref<1xf32, #tpu.memory_space<smem>>
    %10 = vector.broadcast %9 : f32 to vector<1x128xf32>
    %11 = arith.addf %5, %10 : vector<1x128xf32>
    %12 = vector.broadcast %11 : vector<1x128xf32> to vector<8x128xf32>
    %13 = arith.addf %4, %12 : vector<8x128xf32>
    %14 = math.tanh %13 : vector<8x128xf32>
    %15 = arith.truncf %14 : vector<8x128xf32> to vector<8x128xbf16>
    %c0_6 = arith.constant 0 : index
    %c0_7 = arith.constant 0 : index
    %16 = vector.load %arg5[%c0_6, %c0_7] : memref<128x128xbf16, #tpu.memory_space<vmem>>, vector<128x128xbf16>
    %cst_8 = arith.constant dense<0.000000e+00> : vector<8x128xf32>
    %17 = tpu.matmul %15, %16, %cst_8 {dimension_numbers = #tpu.dot_dimension_numbers<[1], [0], [0], [1], [0, 0, 1, 1], [], []>} : vector<8x128xbf16>, vector<128x128xbf16>, vector<8x128xf32> -> vector<8x128xf32>
    %c0_9 = arith.constant 0 : index
    %c0_10 = arith.constant 0 : index
    %18 = vector.load %arg6[%c0_9, %c0_10] : memref<1x128xf32, #tpu.memory_space<vmem>>, vector<1x128xf32>
    %19 = vector.broadcast %18 : vector<1x128xf32> to vector<8x128xf32>
    %20 = arith.addf %17, %19 : vector<8x128xf32>
    %21 = vector.shape_cast %20 : vector<8x128xf32> to vector<1x8x128xf32>
    %c0_11 = arith.constant 0 : index
    %c0_12 = arith.constant 0 : index
    %c0_13 = arith.constant 0 : index
    %22 = vector.load %arg7[%c0_11, %c0_12, %c0_13] : memref<1x8x128xf32, #tpu.memory_space<vmem>>, vector<1x8x128xf32>
    tpu.vector_store %arg7[%c0_11, %c0_12, %c0_13], %21 {strides = array<i32>} : memref<1x8x128xf32, #tpu.memory_space<vmem>>, vector<1x8x128xf32>,
    return
  }
  func.func @transform_0(%arg0: i32, %arg1: memref<1xf32, #tpu.memory_space<smem>>) -> (i32, i32, i32) {
    %c0_i32 = arith.constant 0 : i32
    %c0_i32_0 = arith.constant 0 : i32
    %c0_i32_1 = arith.constant 0 : i32
    return %arg0, %c0_i32, %c0_i32_0 : i32, i32, i32
  }
  func.func @transform_1(%arg0: i32, %arg1: memref<1xf32, #tpu.memory_space<smem>>) -> (i32, i32) {
    %c0_i32 = arith.constant 0 : i32
    %c0_i32_0 = arith.constant 0 : i32
    %c0_i32_1 = arith.constant 0 : i32
    return %c0_i32, %c0_i32_0 : i32, i32
  }
  func.func @transform_2(%arg0: i32, %arg1: memref<1xf32, #tpu.memory_space<smem>>) -> (i32, i32) {
    %c0_i32 = arith.constant 0 : i32
    %c0_i32_0 = arith.constant 0 : i32
    %c0_i32_1 = arith.constant 0 : i32
    return %c0_i32, %c0_i32_0 : i32, i32
  }
  func.func @transform_3(%arg0: i32, %arg1: memref<1xf32, #tpu.memory_space<smem>>) -> (i32, i32) {
    %c0_i32 = arith.constant 0 : i32
    %c0_i32_0 = arith.constant 0 : i32
    %c0_i32_1 = arith.constant 0 : i32
    return %c0_i32, %c0_i32_0 : i32, i32
  }
  func.func @transform_4(%arg0: i32, %arg1: memref<1xf32, #tpu.memory_space<smem>>) -> (i32, i32) {
    %c0_i32 = arith.constant 0 : i32
    %c0_i32_0 = arith.constant 0 : i32
    %c0_i32_1 = arith.constant 0 : i32
    return %c0_i32, %c0_i32_0 : i32, i32
  }
  func.func @transform_5(%arg0: i32, %arg1: memref<1xf32, #tpu.memory_space<smem>>) -> (i32, i32, i32) {
    %c0_i32 = arith.constant 0 : i32
    %c0_i32_0 = arith.constant 0 : i32
    %c0_i32_1 = arith.constant 0 : i32
    return %arg0, %c0_i32, %c0_i32_0 : i32, i32, i32
  }
}

</mosaic_0001>

<llo_original>
// kernel: tpu_custom_call.1
$region0: #{tpu_custom_call.1}
  #allocation0 [shape = 'u32[]', space=smem, size = 0x4, offset = 0x4, fixed_abs, tag = 'smem constant byte address 0x4 - core index']
  #allocation1 [shape = 'u32[144,128]{1,0:T(1,128)}', space=vmem, size = 0x12000, scoped, tag = 'internal scratch']
  #allocation2 [shape = 's32[1]{0}', space=sflag, size = 0x4, scoped, tag = 'scoped memory for tpu_custom_call.1']
  #allocation3 [shape = 'f32[1]{0:T(128)S(6)}', space=smem, size = 0x200, scoped, tag = 'prefetched SMEM operand 0']
  %s0 = inlined_call_operand.<no memory space> [shape: f32[1], index: 0, kind: input, shape index: {}]
  %s1 = inlined_call_operand.hbm [shape: f32[1,8,128], index: 1, kind: input, shape index: {}]
  %s2 = inlined_call_operand.hbm [shape: bf16[128,128], index: 2, kind: input, shape index: {}]
  %s3 = inlined_call_operand.vmem [shape: f32[1,128], index: 3, kind: input, shape index: {}]
  %s4 = inlined_call_operand.hbm [shape: bf16[128,128], index: 4, kind: input, shape index: {}]
  %s5 = inlined_call_operand.vmem [shape: f32[1,128], index: 5, kind: input, shape index: {}]
  %s6 = inlined_call_operand.hbm [shape: f32[1,8,128], index: 6, kind: output, shape index: {}]
  %s7 = sld [smem:[#allocation0]]
  $region42: #{tpu_custom_call.1} parent=0
    _
  %s9 = ssub.s32 1, %s7
  %s10 = scalar_select 0, %s9, %s7
  %11 = sst [smem:[#allocation3]] %s0
  $region1: #{tpu_custom_call.1} parent=0
    #allocation4 [shape = 'u8[4096]{0}', space=vmem, size = 0x1000, scoped, tag = 'input window, operand 1, single buffered']
    #allocation5 [shape = 's32[1]{0}', space=sflag, size = 0x4, scoped, tag = 'scoped memory for tpu_custom_call.1']
    #allocation6 [shape = 's32[1]{0}', space=sflag, size = 0x4, scoped, tag = 'scoped memory for tpu_custom_call.1']
    #allocation7 [shape = 'u8[32768]{0}', space=vmem, size = 0x8000, scoped, tag = 'input window, operand 2, single buffered']
    #allocation8 [shape = 's32[1]{0}', space=sflag, size = 0x4, scoped, tag = 'scoped memory for tpu_custom_call.1']
    #allocation9 [shape = 'u8[32768]{0}', space=vmem, size = 0x8000, scoped, tag = 'input window, operand 4, single buffered']
    #allocation10 [shape = 'u8[4096]{0}', space=vmem, size = 0x1000, scoped, tag = 'output window, operand 0, single buffered']
    %12 = vsyncpa [#allocation5], 0
    %13 = vsyncpa [#allocation8], 0
    %14 = vsyncpa [#allocation6], 0
    // Predicated region
    $region2: #{tpu_custom_call.1} parent=1 // pred_check
      _
    $region3: #{tpu_custom_call.1} parent=1 // pred_check_branch
      %16 = sbr.rel (0) target = $region5
    $region4: #{tpu_custom_call.1} parent=1 // pred_region
      %s18 = ssub.s32 128, 128
      %19 = vsyncadd [#allocation5], %s18
      %s21 = sshll.u32 [#allocation4], 4
      %s22 = int_to_ptr.vmem [resolvable:$true] %s21
      %24 = dma.hbm_to_vmem [thread:$0]  %s1, 128, %s22, [#allocation5]
    $region5: #{tpu_custom_call.1} parent=1 // pred_fallthru
      _
    // Predicated region
    $region6: #{tpu_custom_call.1} parent=1 // pred_check
      _
    $region7: #{tpu_custom_call.1} parent=1 // pred_check_branch
      %26 = sbr.rel (0) target = $region9
    $region8: #{tpu_custom_call.1} parent=1 // pred_region
      %s28 = ssub.s32 1024, 1024
      %29 = vsyncadd [#allocation8], %s28
      %s30 = sshll.u32 [#allocation7], 4
      %s31 = int_to_ptr.vmem [resolvable:$true] %s30
      %36 = dma.hbm_to_vmem [thread:$0]  %s2, 1024, %s31, [#allocation8], 64, 64, 4
    $region9: #{tpu_custom_call.1} parent=1 // pred_fallthru
      _
    // Predicated region
    $region10: #{tpu_custom_call.1} parent=1 // pred_check
      _
    $region11: #{tpu_custom_call.1} parent=1 // pred_check_branch
      %38 = sbr.rel (0) target = $region13
    $region12: #{tpu_custom_call.1} parent=1 // pred_region
      _
    $region13: #{tpu_custom_call.1} parent=1 // pred_fallthru
      _
    // Predicated region
    $region14: #{tpu_custom_call.1} parent=1 // pred_check
      _
    $region15: #{tpu_custom_call.1} parent=1 // pred_check_branch
      %40 = sbr.rel (0) target = $region17
    $region16: #{tpu_custom_call.1} parent=1 // pred_region
      %s42 = ssub.s32 1024, 1024
      %43 = vsyncadd [#allocation8], %s42
      %s44 = sshll.u32 [#allocation9], 4
      %s45 = int_to_ptr.vmem [resolvable:$true] %s44
      %50 = dma.hbm_to_vmem [thread:$0]  %s4, 1024, %s45, [#allocation8], 64, 64, 4
    $region17: #{tpu_custom_call.1} parent=1 // pred_fallthru
      _
    // Predicated region
    $region18: #{tpu_custom_call.1} parent=1 // pred_check
      _
    $region19: #{tpu_custom_call.1} parent=1 // pred_check_branch
      %52 = sbr.rel (0) target = $region21
    $region20: #{tpu_custom_call.1} parent=1 // pred_region
      _
    $region21: #{tpu_custom_call.1} parent=1 // pred_fallthru
      _
    // Predicated region
    $region22: #{tpu_custom_call.1} parent=1 // pred_check
      _
    $region23: #{tpu_custom_call.1} parent=1 // pred_check_branch
      %54 = sbr.rel (0) target = $region25
    $region24: #{tpu_custom_call.1} parent=1 // pred_region
      %55 = dma.done [#allocation5], 128
    $region25: #{tpu_custom_call.1} parent=1 // pred_fallthru
      _
    // Predicated region
    $region26: #{tpu_custom_call.1} parent=1 // pred_check
      _
    $region27: #{tpu_custom_call.1} parent=1 // pred_check_branch
      %57 = sbr.rel (0) target = $region29
    $region28: #{tpu_custom_call.1} parent=1 // pred_region
      %58 = dma.done [#allocation8], 1024
    $region29: #{tpu_custom_call.1} parent=1 // pred_fallthru
      _
    // Predicated region
    $region30: #{tpu_custom_call.1} parent=1 // pred_check
      _
    $region31: #{tpu_custom_call.1} parent=1 // pred_check_branch
      %60 = sbr.rel (0) target = $region33
    $region32: #{tpu_custom_call.1} parent=1 // pred_region
      %61 = dma.done [#allocation8], 1024
    $region33: #{tpu_custom_call.1} parent=1 // pred_fallthru
      _
    %v63 = vld [vmem:[#allocation4] sm:$0xff]
    %v64 = vpack.c.bf16 %v63, %v63
    %v65 = vld [vmem:[#allocation7] sm:$0xf]
    %v66 = vld [vmem:[#allocation7 + $0x4] sm:$0xf]
    %v67 = vld [vmem:[#allocation7 + $0x8] sm:$0xf]
    %v68 = vld [vmem:[#allocation7 + $0xc] sm:$0xf]
    %v69 = vld [vmem:[#allocation7 + $0x10] sm:$0xf]
    %v70 = vld [vmem:[#allocation7 + $0x14] sm:$0xf]
    %v71 = vld [vmem:[#allocation7 + $0x18] sm:$0xf]
    %v72 = vld [vmem:[#allocation7 + $0x1c] sm:$0xf]
    %v73 = vld [vmem:[#allocation7 + $0x20] sm:$0xf]
    %v74 = vld [vmem:[#allocation7 + $0x24] sm:$0xf]
    %v75 = vld [vmem:[#allocation7 + $0x28] sm:$0xf]
    %v76 = vld [vmem:[#allocation7 + $0x2c] sm:$0xf]
    %v77 = vld [vmem:[#allocation7 + $0x30] sm:$0xf]
    %v78 = vld [vmem:[#allocation7 + $0x34] sm:$0xf]
    %v79 = vld [vmem:[#allocation7 + $0x38] sm:$0xf]
    %v80 = vld [vmem:[#allocation7 + $0x3c] sm:$0xf]
    %v81 = vld [vmem:[%s3] sm:$0x1]
    %s82 = sld [smem:[#allocation3]]
    %v83 = vstv %s82
    %v84 = vadd.f32 %v81, %v83
    %v86 = vlaneseq
    %v87 = vshrl.u32 %v86, 7
    %v88 = vsub.s32 0, %v87
    %v89 = vrot.slane %v84, %v88
    %v107 = vunpack.c.l.b16 %v65
    %v108 = vunpack.c.l.b16 %v66
    %v109 = vunpack.c.l.b16 %v67
    %v110 = vunpack.c.l.b16 %v68
    %v111 = vunpack.c.l.b16 %v69
    %v112 = vunpack.c.l.b16 %v70
    %v113 = vunpack.c.l.b16 %v71
    %v114 = vunpack.c.l.b16 %v72
    %v115 = vunpack.c.l.b16 %v73
    %v116 = vunpack.c.l.b16 %v74
    %v117 = vunpack.c.l.b16 %v75
    %v118 = vunpack.c.l.b16 %v76
    %v119 = vunpack.c.l.b16 %v77
    %v120 = vunpack.c.l.b16 %v78
    %v121 = vunpack.c.l.b16 %v79
    %v122 = vunpack.c.l.b16 %v80
    %v123 = vpack.c.b16 %v108, %v107
    %v124 = vpack.c.b16 %v110, %v109
    %v125 = vpack.c.b16 %v112, %v111
    %v126 = vpack.c.b16 %v114, %v113
    %v127 = vpack.c.b16 %v116, %v115
    %v128 = vpack.c.b16 %v118, %v117
    %v129 = vpack.c.b16 %v120, %v119
    %v130 = vpack.c.b16 %v122, %v121
    %139 = vmatprep.subr.bf16.mxu0 0
    %140 = vmatpush1.bf16.msra.mxu0 %v123
    %141 = vmatprep.subr.bf16.mxu0 0
    %142 = vmatpush1.bf16.msra.mxu0 %v124
    %143 = vmatprep.subr.bf16.mxu0 0
    %144 = vmatpush1.bf16.msra.mxu0 %v125
    %145 = vmatprep.subr.bf16.mxu0 0
    %146 = vmatpush1.bf16.msra.mxu0 %v126
    %147 = vmatprep.subr.bf16.mxu0 0
    %148 = vmatpush1.bf16.msra.mxu0 %v127
    %149 = vmatprep.subr.bf16.mxu0 0
    %150 = vmatpush1.bf16.msra.mxu0 %v128
    %151 = vmatprep.subr.bf16.mxu0 0
    %152 = vmatpush1.bf16.msra.mxu0 %v129
    %153 = vmatprep.subr.bf16.mxu0 0
    %154 = vmatpush1.bf16.msra.mxu0 %v130
    %155 = vmatprep.subr.bf16.mxu0 0
    %156 = vmatpush1.bf16.msra.mxu0 0
    %157 = vmatprep.subr.bf16.mxu0 0
    %158 = vmatpush1.bf16.msra.mxu0 0
    %159 = vmatprep.subr.bf16.mxu0 0
    %160 = vmatpush1.bf16.msra.mxu0 0
    %161 = vmatprep.subr.bf16.mxu0 0
    %162 = vmatpush1.bf16.msra.mxu0 0
    %163 = vmatprep.subr.bf16.mxu0 0
    %164 = vmatpush1.bf16.msra.mxu0 0
    %165 = vmatprep.subr.bf16.mxu0 0
    %166 = vmatpush1.bf16.msra.mxu0 0
    %167 = vmatprep.subr.bf16.mxu0 0
    %168 = vmatpush1.bf16.msra.mxu0 0
    %169 = vmatprep.subr.bf16.mxu0 0
    %170 = vmatpush1.bf16.msra.mxu0 0
    %171 = vmatprep.mubr.bf16.mxu0 0
    %172 = vmatmul.mubr.bf16.gmra.mrb[0].mxu0 %v64
    %v173 = vpop.f32.mrb[0].mxu0
    %v174 = vadd.f32 %v89, %v173
    %v175 = vpop.f32.mrb[0].mxu0
    %v176 = vpop.f32.mrb[0].mxu0
    %v177 = vpop.f32.mrb[0].mxu0
    %178 = vdwg.mxu0
    %v179 = vtanh.pop %v174
    %v180 = vpack.c.bf16 %v179, %v179
    %v181 = vld [vmem:[#allocation9] sm:$0xf]
    %v182 = vld [vmem:[#allocation9 + $0x4] sm:$0xf]
    %v183 = vld [vmem:[#allocation9 + $0x8] sm:$0xf]
    %v184 = vld [vmem:[#allocation9 + $0xc] sm:$0xf]
    %v185 = vld [vmem:[#allocation9 + $0x10] sm:$0xf]
    %v186 = vld [vmem:[#allocation9 + $0x14] sm:$0xf]
    %v187 = vld [vmem:[#allocation9 + $0x18] sm:$0xf]
    %v188 = vld [vmem:[#allocation9 + $0x1c] sm:$0xf]
    %v189 = vld [vmem:[#allocation9 + $0x20] sm:$0xf]
    %v190 = vld [vmem:[#allocation9 + $0x24] sm:$0xf]
    %v191 = vld [vmem:[#allocation9 + $0x28] sm:$0xf]
    %v192 = vld [vmem:[#allocation9 + $0x2c] sm:$0xf]
    %v193 = vld [vmem:[#allocation9 + $0x30] sm:$0xf]
    %v194 = vld [vmem:[#allocation9 + $0x34] sm:$0xf]
    %v195 = vld [vmem:[#allocation9 + $0x38] sm:$0xf]
    %v196 = vld [vmem:[#allocation9 + $0x3c] sm:$0xf]
    %v197 = vld [vmem:[%s5] sm:$0x1]
    %v199 = vlaneseq
    %v200 = vshrl.u32 %v199, 7
    %v201 = vsub.s32 0, %v200
    %v202 = vrot.slane %v197, %v201
    %v220 = vunpack.c.l.b16 %v181
    %v221 = vunpack.c.l.b16 %v182
    %v222 = vunpack.c.l.b16 %v183
    %v223 = vunpack.c.l.b16 %v184
    %v224 = vunpack.c.l.b16 %v185
    %v225 = vunpack.c.l.b16 %v186
    %v226 = vunpack.c.l.b16 %v187
    %v227 = vunpack.c.l.b16 %v188
    %v228 = vunpack.c.l.b16 %v189
    %v229 = vunpack.c.l.b16 %v190
    %v230 = vunpack.c.l.b16 %v191
    %v231 = vunpack.c.l.b16 %v192
    %v232 = vunpack.c.l.b16 %v193
    %v233 = vunpack.c.l.b16 %v194
    %v234 = vunpack.c.l.b16 %v195
    %v235 = vunpack.c.l.b16 %v196
    %v236 = vpack.c.b16 %v221, %v220
    %v237 = vpack.c.b16 %v223, %v222
    %v238 = vpack.c.b16 %v225, %v224
    %v239 = vpack.c.b16 %v227, %v226
    %v240 = vpack.c.b16 %v229, %v228
    %v241 = vpack.c.b16 %v231, %v230
    %v242 = vpack.c.b16 %v233, %v232
    %v243 = vpack.c.b16 %v235, %v234
    %252 = vmatprep.subr.bf16.mxu0 0
    %253 = vmatpush1.bf16.msra.mxu0 %v236
    %254 = vmatprep.subr.bf16.mxu0 0
    %255 = vmatpush1.bf16.msra.mxu0 %v237
    %256 = vmatprep.subr.bf16.mxu0 0
    %257 = vmatpush1.bf16.msra.mxu0 %v238
    %258 = vmatprep.subr.bf16.mxu0 0
    %259 = vmatpush1.bf16.msra.mxu0 %v239
    %260 = vmatprep.subr.bf16.mxu0 0
    %261 = vmatpush1.bf16.msra.mxu0 %v240
    %262 = vmatprep.subr.bf16.mxu0 0
    %263 = vmatpush1.bf16.msra.mxu0 %v241
    %264 = vmatprep.subr.bf16.mxu0 0
    %265 = vmatpush1.bf16.msra.mxu0 %v242
    %266 = vmatprep.subr.bf16.mxu0 0
    %267 = vmatpush1.bf16.msra.mxu0 %v243
    %268 = vmatprep.subr.bf16.mxu0 0
    %269 = vmatpush1.bf16.msra.mxu0 0
    %270 = vmatprep.subr.bf16.mxu0 0
    %271 = vmatpush1.bf16.msra.mxu0 0
    %272 = vmatprep.subr.bf16.mxu0 0
    %273 = vmatpush1.bf16.msra.mxu0 0
    %274 = vmatprep.subr.bf16.mxu0 0
    %275 = vmatpush1.bf16.msra.mxu0 0
    %276 = vmatprep.subr.bf16.mxu0 0
    %277 = vmatpush1.bf16.msra.mxu0 0
    %278 = vmatprep.subr.bf16.mxu0 0
    %279 = vmatpush1.bf16.msra.mxu0 0
    %280 = vmatprep.subr.bf16.mxu0 0
    %281 = vmatpush1.bf16.msra.mxu0 0
    %282 = vmatprep.subr.bf16.mxu0 0
    %283 = vmatpush1.bf16.msra.mxu0 0
    %284 = vmatprep.mubr.bf16.mxu0 0
    %285 = vmatmul.mubr.bf16.gmra.mrb[0].mxu0 %v180
    %v286 = vpop.f32.mrb[0].mxu0
    %v287 = vadd.f32 %v202, %v286
    %v288 = vpop.f32.mrb[0].mxu0
    %v289 = vpop.f32.mrb[0].mxu0
    %v290 = vpop.f32.mrb[0].mxu0
    %291 = vdwg.mxu0
    %292 = vst [vmem:[#allocation10] sm:$0xff] %v287
    // Predicated region
    $region34: #{tpu_custom_call.1} parent=1 // pred_check
      _
    $region35: #{tpu_custom_call.1} parent=1 // pred_check_branch
      %294 = sbr.rel (0) target = $region37
    $region36: #{tpu_custom_call.1} parent=1 // pred_region
      %s296 = ssub.s32 128, 128
      %297 = vsyncadd [#allocation6], %s296
      %s299 = sshll.u32 [#allocation10], 4
      %s300 = int_to_ptr.vmem [resolvable:$true] %s299
      %302 = dma.vmem_to_hbm [thread:$0]  %s300, 128, %s6, [#allocation6]
    $region37: #{tpu_custom_call.1} parent=1 // pred_fallthru
      _
    // Predicated region
    $region38: #{tpu_custom_call.1} parent=1 // pred_check
      _
    $region39: #{tpu_custom_call.1} parent=1 // pred_check_branch
      %304 = sbr.rel (0) target = $region41
    $region40: #{tpu_custom_call.1} parent=1 // pred_region
      %305 = dma.done [#allocation6], 128
    $region41: #{tpu_custom_call.1} parent=1 // pred_fallthru
      _
    %306 = vsyncpa [#allocation5], 1
    %307 = vsyncpa [#allocation8], 1
    %308 = vsyncpa [#allocation6], 1

</llo_original>
